<compile_context>
chip_gen: v7x
topology: tpu7x:2x2x1
jax: 0.10.0
libtpu: 0.0.40
codegen_flags: <defaults>
</compile_context>

<pallas_src>
import jax
import jax.numpy as jnp
from jax import lax
from jax.experimental import pallas as pl
from jax.experimental.pallas import tpu as pltpu


def _rnn_recurrence_kernel(proj_ref, wh_ref, wd_ref, bd_ref, out_ref):
    """Serial RNN recurrence + decode, one invocation.

    proj_ref : (T, Bp, Hp)  time-major precomputed x_t @ Wx + b_h
    wh_ref   : (Hp, Hp)
    wd_ref   : (Hp, Dp)
    bd_ref   : (1, Dp)
    out_ref  : (Bp, Dp)
    """
    T = proj_ref.shape[0]
    wh = wh_ref[...]                           # resident across the whole loop

    # h_1 = tanh(x_0 @ Wx + b_h)  (h_0 == 0, so the first Wh matmul is skipped)
    h = jnp.tanh(proj_ref[0])

    # Fully unrolled static loop: per step only h @ Wh (MXU) + add + tanh (EUP).
    for t in range(1, T):
        h = jnp.tanh(proj_ref[t]
                     + jnp.dot(h, wh, preferred_element_type=jnp.float32))

    logits = (jnp.dot(h, wd_ref[...], preferred_element_type=jnp.float32)
              + bd_ref[...])                   # (Bp, Dp), lane-dense
    out_ref[...] = logits.astype(out_ref.dtype)


def _round_up(n, m):
    return ((n + m - 1) // m) * m


def rnn_classifier_forward(x, wx, wh, bh, wd, bd):
    """x: (B, T, D_in) float32 -> logits (B, D_out) float32."""
    B, T, D_in = x.shape
    H = wx.shape[1]
    D_out = wd.shape[1]
    if T < 1:
        raise ValueError("RNN_Classifier requires at least one time step.")

    # Pad to (8, 128)-friendly tiles; zero padding keeps the recurrence exact
    # (padded hidden lanes stay 0, padded batch rows / output lanes are sliced
    # off below).
    Bp = _round_up(B, 8)
    Hp = _round_up(H, 128)
    Dp = _round_up(D_out, 128)

    x_p = jnp.pad(x, ((0, Bp - B), (0, 0), (0, 0)))
    wx_p = jnp.pad(wx, ((0, 0), (0, Hp - H)))
    wh_p = jnp.pad(wh, ((0, Hp - H), (0, Hp - H)))
    bh_p = jnp.pad(bh, ((0, 0), (0, Hp - H)))
    wd_p = jnp.pad(wd, ((0, Hp - H), (0, Dp - D_out)))
    bd_p = jnp.pad(bd, ((0, 0), (0, Dp - D_out)))

    # Input projection for all T steps as ONE batched matmul, emitted directly
    # time-major (T, Bp, Hp) so the kernel consumes it with no relayout.  This
    # also hoists the b_h broadcast out of the recurrent loop.
    proj = jnp.einsum("btd,dh->tbh", x_p, wx_p,
                      preferred_element_type=jnp.float32) + bh_p   # (T, Bp, Hp)

    grid_spec = pltpu.PrefetchScalarGridSpec(
        num_scalar_prefetch=0,
        grid=(1,),                                            # single invocation
        in_specs=[
            pl.BlockSpec((T, Bp, Hp), lambda i: (0, 0, 0)),   # proj (whole seq)
            pl.BlockSpec((Hp, Hp), lambda i: (0, 0)),         # Wh (resident)
            pl.BlockSpec((Hp, Dp), lambda i: (0, 0)),         # Wd
            pl.BlockSpec((1, Dp), lambda i: (0, 0)),          # b_d
        ],
        out_specs=pl.BlockSpec((Bp, Dp), lambda i: (0, 0)),   # lane-dense out
    )

    out_p = pl.pallas_call(
        _rnn_recurrence_kernel,
        out_shape=jax.ShapeDtypeStruct((Bp, Dp), jnp.float32),
        grid_spec=grid_spec,
        compiler_params=pltpu.CompilerParams(
            dimension_semantics=("arbitrary",),
            vmem_limit_bytes=32 * 1024 * 1024,   # explicit budget (v7x-safe)
        ),
    )(proj, wh_p, wd_p, bd_p)

    return out_p[:B, :D_out]


def rnn_classifier_reference(x, wx, wh, bh, wd, bd):
    """Pure-JAX reference (lax.scan) mirroring the PyTorch module."""
    B = x.shape[0]
    H = wx.shape[1]
    x_tm = jnp.transpose(x, (1, 0, 2))               # (T, B, D_in)

    def step(h, x_t):
        h_new = jnp.tanh(x_t @ wx + h @ wh + bh)
        return h_new, None

    h0 = jnp.zeros((B, H), jnp.float32)
    h_last, _ = lax.scan(step, h0, x_tm)
    return h_last @ wd + bd


if __name__ == "__main__":
    # Module hyperparameters (dim_h, dim_in, dim_out) + input sizes.
    B, T, D_in, H, D_out = 2, 8, 4, 32, 10

    key = jax.random.PRNGKey(0)
    kx, kwx, kwh, kbh, kwd, kbd = jax.random.split(key, 6)

    # Deterministic synthetic parameters (shapes match RNN(dim_h, dim_in, dim_out)).
    x = jax.random.normal(kx, (B, T, D_in), jnp.float32)
    wx = jax.random.normal(kwx, (D_in, H), jnp.float32) * 0.3   # input->hidden
    wh = jax.random.normal(kwh, (H, H), jnp.float32) * 0.3      # hidden->hidden
    bh = jax.random.normal(kbh, (1, H), jnp.float32) * 0.1      # hidden bias
    wd = jax.random.normal(kwd, (H, D_out), jnp.float32) * 0.3  # decoder weight
    bd = jax.random.normal(kbd, (1, D_out), jnp.float32) * 0.1  # decoder bias

    out = rnn_classifier_forward(x, wx, wh, bh, wd, bd)
    out = jax.block_until_ready(out)

    ref = rnn_classifier_reference(x, wx, wh, bh, wd, bd)
    assert out.shape == (B, D_out)
    assert jnp.allclose(out, ref, atol=1e-5, rtol=1e-5), (
        f"mismatch: max abs err {jnp.max(jnp.abs(out - ref))}")

    print("KERNEL_OK")
</pallas_src>

<mosaic_0001>
module attributes {stable_mosaic.version = 11 : i64} {
  func.func @_rnn_recurrence_kernel(%arg0: i32, %arg1: memref<8x8x128xf32, #tpu.memory_space<vmem>>, %arg2: memref<128x128xf32, #tpu.memory_space<vmem>>, %arg3: memref<128x128xf32, #tpu.memory_space<vmem>>, %arg4: memref<1x128xf32, #tpu.memory_space<vmem>>, %arg5: memref<8x128xf32, #tpu.memory_space<vmem>>) attributes {dimension_semantics = [#tpu.dimension_semantics<arbitrary>], iteration_bounds = array<i64: 1>, scalar_prefetch = 0 : i64, scratch_operands = 0 : i64, tpu.core_type = #tpu.core_type<tc>, window_params = [{pipeline_mode = #tpu.pipeline_mode<synchronous>, transform_indices = @transform_0, window_bounds = array<i64: 8, 8, 128>}, {pipeline_mode = #tpu.pipeline_mode<synchronous>, transform_indices = @transform_1, window_bounds = array<i64: 128, 128>}, {pipeline_mode = #tpu.pipeline_mode<synchronous>, transform_indices = @transform_2, window_bounds = array<i64: 128, 128>}, {pipeline_mode = #tpu.pipeline_mode<synchronous>, transform_indices = @transform_3, window_bounds = array<i64: 1, 128>}, {pipeline_mode = #tpu.pipeline_mode<synchronous>, transform_indices = @transform_4, window_bounds = array<i64: 8, 128>}]} {
    %c0 = arith.constant 0 : index
    %c0_0 = arith.constant 0 : index
    %0 = vector.load %arg2[%c0, %c0_0] : memref<128x128xf32, #tpu.memory_space<vmem>>, vector<128x128xf32>
    %c0_1 = arith.constant 0 : index
    %c0_2 = arith.constant 0 : index
    %c0_3 = arith.constant 0 : index
    %1 = vector.load %arg1[%c0_1, %c0_2, %c0_3] : memref<8x8x128xf32, #tpu.memory_space<vmem>>, vector<1x8x128xf32>
    %2 = vector.shape_cast %1 : vector<1x8x128xf32> to vector<8x128xf32>
    %3 = math.tanh %2 : vector<8x128xf32>
    %c1 = arith.constant 1 : index
    %c0_4 = arith.constant 0 : index
    %c0_5 = arith.constant 0 : index
    %4 = vector.load %arg1[%c1, %c0_4, %c0_5] : memref<8x8x128xf32, #tpu.memory_space<vmem>>, vector<1x8x128xf32>
    %5 = vector.shape_cast %4 : vector<1x8x128xf32> to vector<8x128xf32>
    %cst = arith.constant dense<0.000000e+00> : vector<8x128xf32>
    %6 = tpu.matmul %3, %0, %cst {dimension_numbers = #tpu.dot_dimension_numbers<[1], [0], [0], [1], [0, 0, 1, 1], [], []>} : vector<8x128xf32>, vector<128x128xf32>, vector<8x128xf32> -> vector<8x128xf32>
    %7 = arith.addf %5, %6 : vector<8x128xf32>
    %8 = math.tanh %7 : vector<8x128xf32>
    %c2 = arith.constant 2 : index
    %c0_6 = arith.constant 0 : index
    %c0_7 = arith.constant 0 : index
    %9 = vector.load %arg1[%c2, %c0_6, %c0_7] : memref<8x8x128xf32, #tpu.memory_space<vmem>>, vector<1x8x128xf32>
    %10 = vector.shape_cast %9 : vector<1x8x128xf32> to vector<8x128xf32>
    %cst_8 = arith.constant dense<0.000000e+00> : vector<8x128xf32>
    %11 = tpu.matmul %8, %0, %cst_8 {dimension_numbers = #tpu.dot_dimension_numbers<[1], [0], [0], [1], [0, 0, 1, 1], [], []>} : vector<8x128xf32>, vector<128x128xf32>, vector<8x128xf32> -> vector<8x128xf32>
    %12 = arith.addf %10, %11 : vector<8x128xf32>
    %13 = math.tanh %12 : vector<8x128xf32>
    %c3 = arith.constant 3 : index
    %c0_9 = arith.constant 0 : index
    %c0_10 = arith.constant 0 : index
    %14 = vector.load %arg1[%c3, %c0_9, %c0_10] : memref<8x8x128xf32, #tpu.memory_space<vmem>>, vector<1x8x128xf32>
    %15 = vector.shape_cast %14 : vector<1x8x128xf32> to vector<8x128xf32>
    %cst_11 = arith.constant dense<0.000000e+00> : vector<8x128xf32>
    %16 = tpu.matmul %13, %0, %cst_11 {dimension_numbers = #tpu.dot_dimension_numbers<[1], [0], [0], [1], [0, 0, 1, 1], [], []>} : vector<8x128xf32>, vector<128x128xf32>, vector<8x128xf32> -> vector<8x128xf32>
    %17 = arith.addf %15, %16 : vector<8x128xf32>
    %18 = math.tanh %17 : vector<8x128xf32>
    %c4 = arith.constant 4 : index
    %c0_12 = arith.constant 0 : index
    %c0_13 = arith.constant 0 : index
    %19 = vector.load %arg1[%c4, %c0_12, %c0_13] : memref<8x8x128xf32, #tpu.memory_space<vmem>>, vector<1x8x128xf32>
    %20 = vector.shape_cast %19 : vector<1x8x128xf32> to vector<8x128xf32>
    %cst_14 = arith.constant dense<0.000000e+00> : vector<8x128xf32>
    %21 = tpu.matmul %18, %0, %cst_14 {dimension_numbers = #tpu.dot_dimension_numbers<[1], [0], [0], [1], [0, 0, 1, 1], [], []>} : vector<8x128xf32>, vector<128x128xf32>, vector<8x128xf32> -> vector<8x128xf32>
    %22 = arith.addf %20, %21 : vector<8x128xf32>
    %23 = math.tanh %22 : vector<8x128xf32>
    %c5 = arith.constant 5 : index
    %c0_15 = arith.constant 0 : index
    %c0_16 = arith.constant 0 : index
    %24 = vector.load %arg1[%c5, %c0_15, %c0_16] : memref<8x8x128xf32, #tpu.memory_space<vmem>>, vector<1x8x128xf32>
    %25 = vector.shape_cast %24 : vector<1x8x128xf32> to vector<8x128xf32>
    %cst_17 = arith.constant dense<0.000000e+00> : vector<8x128xf32>
    %26 = tpu.matmul %23, %0, %cst_17 {dimension_numbers = #tpu.dot_dimension_numbers<[1], [0], [0], [1], [0, 0, 1, 1], [], []>} : vector<8x128xf32>, vector<128x128xf32>, vector<8x128xf32> -> vector<8x128xf32>
    %27 = arith.addf %25, %26 : vector<8x128xf32>
    %28 = math.tanh %27 : vector<8x128xf32>
    %c6 = arith.constant 6 : index
    %c0_18 = arith.constant 0 : index
    %c0_19 = arith.constant 0 : index
    %29 = vector.load %arg1[%c6, %c0_18, %c0_19] : memref<8x8x128xf32, #tpu.memory_space<vmem>>, vector<1x8x128xf32>
    %30 = vector.shape_cast %29 : vector<1x8x128xf32> to vector<8x128xf32>
    %cst_20 = arith.constant dense<0.000000e+00> : vector<8x128xf32>
    %31 = tpu.matmul %28, %0, %cst_20 {dimension_numbers = #tpu.dot_dimension_numbers<[1], [0], [0], [1], [0, 0, 1, 1], [], []>} : vector<8x128xf32>, vector<128x128xf32>, vector<8x128xf32> -> vector<8x128xf32>
    %32 = arith.addf %30, %31 : vector<8x128xf32>
    %33 = math.tanh %32 : vector<8x128xf32>
    %c7 = arith.constant 7 : index
    %c0_21 = arith.constant 0 : index
    %c0_22 = arith.constant 0 : index
    %34 = vector.load %arg1[%c7, %c0_21, %c0_22] : memref<8x8x128xf32, #tpu.memory_space<vmem>>, vector<1x8x128xf32>
    %35 = vector.shape_cast %34 : vector<1x8x128xf32> to vector<8x128xf32>
    %cst_23 = arith.constant dense<0.000000e+00> : vector<8x128xf32>
    %36 = tpu.matmul %33, %0, %cst_23 {dimension_numbers = #tpu.dot_dimension_numbers<[1], [0], [0], [1], [0, 0, 1, 1], [], []>} : vector<8x128xf32>, vector<128x128xf32>, vector<8x128xf32> -> vector<8x128xf32>
    %37 = arith.addf %35, %36 : vector<8x128xf32>
    %38 = math.tanh %37 : vector<8x128xf32>
    %c0_24 = arith.constant 0 : index
    %c0_25 = arith.constant 0 : index
    %39 = vector.load %arg3[%c0_24, %c0_25] : memref<128x128xf32, #tpu.memory_space<vmem>>, vector<128x128xf32>
    %cst_26 = arith.constant dense<0.000000e+00> : vector<8x128xf32>
    %40 = tpu.matmul %38, %39, %cst_26 {dimension_numbers = #tpu.dot_dimension_numbers<[1], [0], [0], [1], [0, 0, 1, 1], [], []>} : vector<8x128xf32>, vector<128x128xf32>, vector<8x128xf32> -> vector<8x128xf32>
    %c0_27 = arith.constant 0 : index
    %c0_28 = arith.constant 0 : index
    %41 = vector.load %arg4[%c0_27, %c0_28] : memref<1x128xf32, #tpu.memory_space<vmem>>, vector<1x128xf32>
    %42 = vector.broadcast %41 : vector<1x128xf32> to vector<8x128xf32>
    %43 = arith.addf %40, %42 : vector<8x128xf32>
    %c0_29 = arith.constant 0 : index
    %c0_30 = arith.constant 0 : index
    %44 = vector.load %arg5[%c0_29, %c0_30] : memref<8x128xf32, #tpu.memory_space<vmem>>, vector<8x128xf32>
    tpu.vector_store %arg5[%c0_29, %c0_30], %43 {strides = array<i32>} : memref<8x128xf32, #tpu.memory_space<vmem>>, vector<8x128xf32>,
    return
  }
  func.func @transform_0(%arg0: i32) -> (i32, i32, i32) {
    %c0_i32 = arith.constant 0 : i32
    %c0_i32_0 = arith.constant 0 : i32
    %c0_i32_1 = arith.constant 0 : i32
    %c0_i32_2 = arith.constant 0 : i32
    return %c0_i32, %c0_i32_0, %c0_i32_1 : i32, i32, i32
  }
  func.func @transform_1(%arg0: i32) -> (i32, i32) {
    %c0_i32 = arith.constant 0 : i32
    %c0_i32_0 = arith.constant 0 : i32
    %c0_i32_1 = arith.constant 0 : i32
    return %c0_i32, %c0_i32_0 : i32, i32
  }
  func.func @transform_2(%arg0: i32) -> (i32, i32) {
    %c0_i32 = arith.constant 0 : i32
    %c0_i32_0 = arith.constant 0 : i32
    %c0_i32_1 = arith.constant 0 : i32
    return %c0_i32, %c0_i32_0 : i32, i32
  }
  func.func @transform_3(%arg0: i32) -> (i32, i32) {
    %c0_i32 = arith.constant 0 : i32
    %c0_i32_0 = arith.constant 0 : i32
    %c0_i32_1 = arith.constant 0 : i32
    return %c0_i32, %c0_i32_0 : i32, i32
  }
  func.func @transform_4(%arg0: i32) -> (i32, i32) {
    %c0_i32 = arith.constant 0 : i32
    %c0_i32_0 = arith.constant 0 : i32
    %c0_i32_1 = arith.constant 0 : i32
    return %c0_i32, %c0_i32_0 : i32, i32
  }
}

</mosaic_0001>

<llo_original>
// kernel: tpu_custom_call.1
$region0: #{tpu_custom_call.1}
  #allocation0 [shape = 'u32[]', space=smem, size = 0x4, offset = 0x4, fixed_abs, tag = 'smem constant byte address 0x4 - core index']
  #allocation1 [shape = 'u32[144,128]{1,0:T(1,128)}', space=vmem, size = 0x12000, scoped, tag = 'internal scratch']
  %s0 = inlined_call_operand.hbm [shape: f32[8,8,128], index: 0, kind: input, shape index: {}]
  %s1 = inlined_call_operand.hbm [shape: f32[128,128], index: 1, kind: input, shape index: {}]
  %s2 = inlined_call_operand.hbm [shape: f32[128,128], index: 2, kind: input, shape index: {}]
  %s3 = inlined_call_operand.vmem [shape: f32[1,128], index: 3, kind: input, shape index: {}]
  %s4 = inlined_call_operand.hbm [shape: f32[8,128], index: 4, kind: output, shape index: {}]
  %s5 = sld [smem:[#allocation0]]
  $region38: #{tpu_custom_call.1} parent=0
    _
  %s7 = ssub.s32 1, %s5
  %s8 = scalar_select 0, %s7, %s5
  $region1: #{tpu_custom_call.1} parent=0
    #allocation2 [shape = 'u8[32768]{0}', space=vmem, size = 0x8000, scoped, tag = 'input window, operand 0, single buffered']
    #allocation3 [shape = 's32[1]{0}', space=sflag, size = 0x4, scoped, tag = 'scoped memory for tpu_custom_call.1']
    #allocation4 [shape = 's32[1]{0}', space=sflag, size = 0x4, scoped, tag = 'scoped memory for tpu_custom_call.1']
    #allocation5 [shape = 'u8[65536]{0}', space=vmem, size = 0x10000, scoped, tag = 'input window, operand 1, single buffered']
    #allocation6 [shape = 's32[1]{0}', space=sflag, size = 0x4, scoped, tag = 'scoped memory for tpu_custom_call.1']
    #allocation7 [shape = 'u8[65536]{0}', space=vmem, size = 0x10000, scoped, tag = 'input window, operand 2, single buffered']
    #allocation8 [shape = 'u8[4096]{0}', space=vmem, size = 0x1000, scoped, tag = 'output window, operand 0, single buffered']
    %9 = vsyncpa [#allocation3], 0
    %10 = vsyncpa [#allocation6], 0
    %11 = vsyncpa [#allocation4], 0
    // Predicated region
    $region2: #{tpu_custom_call.1} parent=1 // pred_check
      _
    $region3: #{tpu_custom_call.1} parent=1 // pred_check_branch
      %13 = sbr.rel (0) target = $region5
    $region4: #{tpu_custom_call.1} parent=1 // pred_region
      %s15 = ssub.s32 1024, 1024
      %16 = vsyncadd [#allocation3], %s15
      %s17 = sshll.u32 [#allocation2], 4
      %s18 = int_to_ptr.vmem [resolvable:$true] %s17
      %23 = dma.hbm_to_vmem [thread:$0]  %s0, 1024, %s18, [#allocation3], 128, 128, 8
    $region5: #{tpu_custom_call.1} parent=1 // pred_fallthru
      _
    // Predicated region
    $region6: #{tpu_custom_call.1} parent=1 // pred_check
      _
    $region7: #{tpu_custom_call.1} parent=1 // pred_check_branch
      %25 = sbr.rel (0) target = $region9
    $region8: #{tpu_custom_call.1} parent=1 // pred_region
      %s27 = ssub.s32 2048, 2048
      %28 = vsyncadd [#allocation6], %s27
      %s29 = sshll.u32 [#allocation5], 4
      %s30 = int_to_ptr.vmem [resolvable:$true] %s29
      %35 = dma.hbm_to_vmem [thread:$0]  %s1, 2048, %s30, [#allocation6], 128, 128, 8
    $region9: #{tpu_custom_call.1} parent=1 // pred_fallthru
      _
    // Predicated region
    $region10: #{tpu_custom_call.1} parent=1 // pred_check
      _
    $region11: #{tpu_custom_call.1} parent=1 // pred_check_branch
      %37 = sbr.rel (0) target = $region13
    $region12: #{tpu_custom_call.1} parent=1 // pred_region
      %s39 = ssub.s32 2048, 2048
      %40 = vsyncadd [#allocation6], %s39
      %s41 = sshll.u32 [#allocation7], 4
      %s42 = int_to_ptr.vmem [resolvable:$true] %s41
      %47 = dma.hbm_to_vmem [thread:$0]  %s2, 2048, %s42, [#allocation6], 128, 128, 8
    $region13: #{tpu_custom_call.1} parent=1 // pred_fallthru
      _
    // Predicated region
    $region14: #{tpu_custom_call.1} parent=1 // pred_check
      _
    $region15: #{tpu_custom_call.1} parent=1 // pred_check_branch
      %49 = sbr.rel (0) target = $region17
    $region16: #{tpu_custom_call.1} parent=1 // pred_region
      _
    $region17: #{tpu_custom_call.1} parent=1 // pred_fallthru
      _
    // Predicated region
    $region18: #{tpu_custom_call.1} parent=1 // pred_check
      _
    $region19: #{tpu_custom_call.1} parent=1 // pred_check_branch
      %51 = sbr.rel (0) target = $region21
    $region20: #{tpu_custom_call.1} parent=1 // pred_region
      %52 = dma.done [#allocation3], 1024
    $region21: #{tpu_custom_call.1} parent=1 // pred_fallthru
      _
    // Predicated region
    $region22: #{tpu_custom_call.1} parent=1 // pred_check
      _
    $region23: #{tpu_custom_call.1} parent=1 // pred_check_branch
      %54 = sbr.rel (0) target = $region25
    $region24: #{tpu_custom_call.1} parent=1 // pred_region
      %55 = dma.done [#allocation6], 2048
    $region25: #{tpu_custom_call.1} parent=1 // pred_fallthru
      _
    // Predicated region
    $region26: #{tpu_custom_call.1} parent=1 // pred_check
      _
    $region27: #{tpu_custom_call.1} parent=1 // pred_check_branch
      %57 = sbr.rel (0) target = $region29
    $region28: #{tpu_custom_call.1} parent=1 // pred_region
      %58 = dma.done [#allocation6], 2048
    $region29: #{tpu_custom_call.1} parent=1 // pred_fallthru
      _
    %v59 = vld [vmem:[#allocation5] sm:$0xff]
    %v60 = vld [vmem:[#allocation5 + $0x8] sm:$0xff]
    %v61 = vld [vmem:[#allocation5 + $0x10] sm:$0xff]
    %v62 = vld [vmem:[#allocation5 + $0x18] sm:$0xff]
    %v63 = vld [vmem:[#allocation5 + $0x20] sm:$0xff]
    %v64 = vld [vmem:[#allocation5 + $0x28] sm:$0xff]
    %v65 = vld [vmem:[#allocation5 + $0x30] sm:$0xff]
    %v66 = vld [vmem:[#allocation5 + $0x38] sm:$0xff]
    %v67 = vld [vmem:[#allocation5 + $0x40] sm:$0xff]
    %v68 = vld [vmem:[#allocation5 + $0x48] sm:$0xff]
    %v69 = vld [vmem:[#allocation5 + $0x50] sm:$0xff]
    %v70 = vld [vmem:[#allocation5 + $0x58] sm:$0xff]
    %v71 = vld [vmem:[#allocation5 + $0x60] sm:$0xff]
    %v72 = vld [vmem:[#allocation5 + $0x68] sm:$0xff]
    %v73 = vld [vmem:[#allocation5 + $0x70] sm:$0xff]
    %v74 = vld [vmem:[#allocation5 + $0x78] sm:$0xff]
    %v75 = vld [vmem:[#allocation2] sm:$0xff]
    %v76 = vtanh.pop %v75
    %s77 = scalar_lea.vmem [#allocation2], 8
    %v78 = vld [vmem:[%s77] sm:$0xff]
    %79 = vmatprep.subr.mxu0 0.0
    %80 = vmatpush1.msra.mxu0 %v59
    %81 = vmatprep.subr.mxu0 0.0
    %82 = vmatpush1.msra.mxu0 %v60
    %83 = vmatprep.subr.mxu0 0.0
    %84 = vmatpush1.msra.mxu0 %v61
    %85 = vmatprep.subr.mxu0 0.0
    %86 = vmatpush1.msra.mxu0 %v62
    %87 = vmatprep.subr.mxu0 0.0
    %88 = vmatpush1.msra.mxu0 %v63
    %89 = vmatprep.subr.mxu0 0.0
    %90 = vmatpush1.msra.mxu0 %v64
    %91 = vmatprep.subr.mxu0 0.0
    %92 = vmatpush1.msra.mxu0 %v65
    %93 = vmatprep.subr.mxu0 0.0
    %94 = vmatpush1.msra.mxu0 %v66
    %95 = vmatprep.subr.mxu0 0.0
    %96 = vmatpush1.msra.mxu0 %v67
    %97 = vmatprep.subr.mxu0 0.0
    %98 = vmatpush1.msra.mxu0 %v68
    %99 = vmatprep.subr.mxu0 0.0
    %100 = vmatpush1.msra.mxu0 %v69
    %101 = vmatprep.subr.mxu0 0.0
    %102 = vmatpush1.msra.mxu0 %v70
    %103 = vmatprep.subr.mxu0 0.0
    %104 = vmatpush1.msra.mxu0 %v71
    %105 = vmatprep.subr.mxu0 0.0
    %106 = vmatpush1.msra.mxu0 %v72
    %107 = vmatprep.subr.mxu0 0.0
    %108 = vmatpush1.msra.mxu0 %v73
    %109 = vmatprep.subr.mxu0 0.0
    %110 = vmatpush1.msra.mxu0 %v74
    %111 = vmatprep.subr.mxu0 0.0
    %112 = vmatpush1.msra.mxu0 0.0
    %113 = vmatprep.subr.mxu0 0.0
    %114 = vmatpush1.msra.mxu0 0.0
    %115 = vmatprep.subr.mxu0 0.0
    %116 = vmatpush1.msra.mxu0 0.0
    %117 = vmatprep.subr.mxu0 0.0
    %118 = vmatpush1.msra.mxu0 0.0
    %119 = vmatprep.subr.mxu0 0.0
    %120 = vmatpush1.msra.mxu0 0.0
    %121 = vmatprep.subr.mxu0 0.0
    %122 = vmatpush1.msra.mxu0 0.0
    %123 = vmatprep.subr.mxu0 0.0
    %124 = vmatpush1.msra.mxu0 0.0
    %125 = vmatprep.subr.mxu0 0.0
    %126 = vmatpush1.msra.mxu0 0.0
    %127 = vmatprep.subr.mxu0 0.0
    %128 = vmatpush1.msra.mxu0 0.0
    %129 = vmatprep.subr.mxu0 0.0
    %130 = vmatpush1.msra.mxu0 0.0
    %131 = vmatprep.subr.mxu0 0.0
    %132 = vmatpush1.msra.mxu0 0.0
    %133 = vmatprep.subr.mxu0 0.0
    %134 = vmatpush1.msra.mxu0 0.0
    %135 = vmatprep.subr.mxu0 0.0
    %136 = vmatpush1.msra.mxu0 0.0
    %137 = vmatprep.subr.mxu0 0.0
    %138 = vmatpush1.msra.mxu0 0.0
    %139 = vmatprep.subr.mxu0 0.0
    %140 = vmatpush1.msra.mxu0 0.0
    %141 = vmatprep.subr.mxu0 0.0
    %142 = vmatpush1.msra.mxu0 0.0
    %143 = vmatprep.mubr.f32.mxu0 0.0
    %144 = vmatmul.mubr.f32.gmra.mrb[0].mxu0 %v76
    %v145 = vpop.f32.mrb[0].mxu0
    %v146 = vadd.f32 0.0, %v145
    %v147 = vpop.f32.mrb[0].mxu0
    %148 = vdwg.mxu0
    %v149 = vadd.f32 %v78, %v146
    %v150 = vtanh.pop %v149
    %s151 = scalar_lea.vmem [#allocation2], 16
    %v152 = vld [vmem:[%s151] sm:$0xff]
    %153 = vmatprep.subr.mxu0 0.0
    %154 = vmatpush1.msra.mxu0 %v59
    %155 = vmatprep.subr.mxu0 0.0
    %156 = vmatpush1.msra.mxu0 %v60
    %157 = vmatprep.subr.mxu0 0.0
    %158 = vmatpush1.msra.mxu0 %v61
    %159 = vmatprep.subr.mxu0 0.0
    %160 = vmatpush1.msra.mxu0 %v62
    %161 = vmatprep.subr.mxu0 0.0
    %162 = vmatpush1.msra.mxu0 %v63
    %163 = vmatprep.subr.mxu0 0.0
    %164 = vmatpush1.msra.mxu0 %v64
    %165 = vmatprep.subr.mxu0 0.0
    %166 = vmatpush1.msra.mxu0 %v65
    %167 = vmatprep.subr.mxu0 0.0
    %168 = vmatpush1.msra.mxu0 %v66
    %169 = vmatprep.subr.mxu0 0.0
    %170 = vmatpush1.msra.mxu0 %v67
    %171 = vmatprep.subr.mxu0 0.0
    %172 = vmatpush1.msra.mxu0 %v68
    %173 = vmatprep.subr.mxu0 0.0
    %174 = vmatpush1.msra.mxu0 %v69
    %175 = vmatprep.subr.mxu0 0.0
    %176 = vmatpush1.msra.mxu0 %v70
    %177 = vmatprep.subr.mxu0 0.0
    %178 = vmatpush1.msra.mxu0 %v71
    %179 = vmatprep.subr.mxu0 0.0
    %180 = vmatpush1.msra.mxu0 %v72
    %181 = vmatprep.subr.mxu0 0.0
    %182 = vmatpush1.msra.mxu0 %v73
    %183 = vmatprep.subr.mxu0 0.0
    %184 = vmatpush1.msra.mxu0 %v74
    %185 = vmatprep.subr.mxu0 0.0
    %186 = vmatpush1.msra.mxu0 0.0
    %187 = vmatprep.subr.mxu0 0.0
    %188 = vmatpush1.msra.mxu0 0.0
    %189 = vmatprep.subr.mxu0 0.0
    %190 = vmatpush1.msra.mxu0 0.0
    %191 = vmatprep.subr.mxu0 0.0
    %192 = vmatpush1.msra.mxu0 0.0
    %193 = vmatprep.subr.mxu0 0.0
    %194 = vmatpush1.msra.mxu0 0.0
    %195 = vmatprep.subr.mxu0 0.0
    %196 = vmatpush1.msra.mxu0 0.0
    %197 = vmatprep.subr.mxu0 0.0
    %198 = vmatpush1.msra.mxu0 0.0
    %199 = vmatprep.subr.mxu0 0.0
    %200 = vmatpush1.msra.mxu0 0.0
    %201 = vmatprep.subr.mxu0 0.0
    %202 = vmatpush1.msra.mxu0 0.0
    %203 = vmatprep.subr.mxu0 0.0
    %204 = vmatpush1.msra.mxu0 0.0
    %205 = vmatprep.subr.mxu0 0.0
    %206 = vmatpush1.msra.mxu0 0.0
    %207 = vmatprep.subr.mxu0 0.0
    %208 = vmatpush1.msra.mxu0 0.0
    %209 = vmatprep.subr.mxu0 0.0
    %210 = vmatpush1.msra.mxu0 0.0
    %211 = vmatprep.subr.mxu0 0.0
    %212 = vmatpush1.msra.mxu0 0.0
    %213 = vmatprep.subr.mxu0 0.0
    %214 = vmatpush1.msra.mxu0 0.0
    %215 = vmatprep.subr.mxu0 0.0
    %216 = vmatpush1.msra.mxu0 0.0
    %217 = vmatprep.mubr.f32.mxu0 0.0
    %218 = vmatmul.mubr.f32.gmra.mrb[0].mxu0 %v150
    %v219 = vpop.f32.mrb[0].mxu0
    %v220 = vadd.f32 0.0, %v219
    %v221 = vpop.f32.mrb[0].mxu0
    %222 = vdwg.mxu0
    %v223 = vadd.f32 %v152, %v220
    %v224 = vtanh.pop %v223
    %s225 = scalar_lea.vmem [#allocation2], 24
    %v226 = vld [vmem:[%s225] sm:$0xff]
    %227 = vmatprep.subr.mxu0 0.0
    %228 = vmatpush1.msra.mxu0 %v59
    %229 = vmatprep.subr.mxu0 0.0
    %230 = vmatpush1.msra.mxu0 %v60
    %231 = vmatprep.subr.mxu0 0.0
    %232 = vmatpush1.msra.mxu0 %v61
    %233 = vmatprep.subr.mxu0 0.0
    %234 = vmatpush1.msra.mxu0 %v62
    %235 = vmatprep.subr.mxu0 0.0
    %236 = vmatpush1.msra.mxu0 %v63
    %237 = vmatprep.subr.mxu0 0.0
    %238 = vmatpush1.msra.mxu0 %v64
    %239 = vmatprep.subr.mxu0 0.0
    %240 = vmatpush1.msra.mxu0 %v65
    %241 = vmatprep.subr.mxu0 0.0
    %242 = vmatpush1.msra.mxu0 %v66
    %243 = vmatprep.subr.mxu0 0.0
    %244 = vmatpush1.msra.mxu0 %v67
    %245 = vmatprep.subr.mxu0 0.0
    %246 = vmatpush1.msra.mxu0 %v68
    %247 = vmatprep.subr.mxu0 0.0
    %248 = vmatpush1.msra.mxu0 %v69
    %249 = vmatprep.subr.mxu0 0.0
    %250 = vmatpush1.msra.mxu0 %v70
    %251 = vmatprep.subr.mxu0 0.0
    %252 = vmatpush1.msra.mxu0 %v71
    %253 = vmatprep.subr.mxu0 0.0
    %254 = vmatpush1.msra.mxu0 %v72
    %255 = vmatprep.subr.mxu0 0.0
    %256 = vmatpush1.msra.mxu0 %v73
    %257 = vmatprep.subr.mxu0 0.0
    %258 = vmatpush1.msra.mxu0 %v74
    %259 = vmatprep.subr.mxu0 0.0
    %260 = vmatpush1.msra.mxu0 0.0
    %261 = vmatprep.subr.mxu0 0.0
    %262 = vmatpush1.msra.mxu0 0.0
    %263 = vmatprep.subr.mxu0 0.0
    %264 = vmatpush1.msra.mxu0 0.0
    %265 = vmatprep.subr.mxu0 0.0
    %266 = vmatpush1.msra.mxu0 0.0
    %267 = vmatprep.subr.mxu0 0.0
    %268 = vmatpush1.msra.mxu0 0.0
    %269 = vmatprep.subr.mxu0 0.0
    %270 = vmatpush1.msra.mxu0 0.0
    %271 = vmatprep.subr.mxu0 0.0
    %272 = vmatpush1.msra.mxu0 0.0
    %273 = vmatprep.subr.mxu0 0.0
    %274 = vmatpush1.msra.mxu0 0.0
    %275 = vmatprep.subr.mxu0 0.0
    %276 = vmatpush1.msra.mxu0 0.0
    %277 = vmatprep.subr.mxu0 0.0
    %278 = vmatpush1.msra.mxu0 0.0
    %279 = vmatprep.subr.mxu0 0.0
    %280 = vmatpush1.msra.mxu0 0.0
    %281 = vmatprep.subr.mxu0 0.0
    %282 = vmatpush1.msra.mxu0 0.0
    %283 = vmatprep.subr.mxu0 0.0
    %284 = vmatpush1.msra.mxu0 0.0
    %285 = vmatprep.subr.mxu0 0.0
    %286 = vmatpush1.msra.mxu0 0.0
    %287 = vmatprep.subr.mxu0 0.0
    %288 = vmatpush1.msra.mxu0 0.0
    %289 = vmatprep.subr.mxu0 0.0
    %290 = vmatpush1.msra.mxu0 0.0
    %291 = vmatprep.mubr.f32.mxu0 0.0
    %292 = vmatmul.mubr.f32.gmra.mrb[0].mxu0 %v224
    %v293 = vpop.f32.mrb[0].mxu0
    %v294 = vadd.f32 0.0, %v293
    %v295 = vpop.f32.mrb[0].mxu0
    %296 = vdwg.mxu0
    %v297 = vadd.f32 %v226, %v294
    %v298 = vtanh.pop %v297
    %s299 = scalar_lea.vmem [#allocation2], 32
    %v300 = vld [vmem:[%s299] sm:$0xff]
    %301 = vmatprep.subr.mxu0 0.0
    %302 = vmatpush1.msra.mxu0 %v59
    %303 = vmatprep.subr.mxu0 0.0
    %304 = vmatpush1.msra.mxu0 %v60
    %305 = vmatprep.subr.mxu0 0.0
    %306 = vmatpush1.msra.mxu0 %v61
    %307 = vmatprep.subr.mxu0 0.0
    %308 = vmatpush1.msra.mxu0 %v62
    %309 = vmatprep.subr.mxu0 0.0
    %310 = vmatpush1.msra.mxu0 %v63
    %311 = vmatprep.subr.mxu0 0.0
    %312 = vmatpush1.msra.mxu0 %v64
    %313 = vmatprep.subr.mxu0 0.0
    %314 = vmatpush1.msra.mxu0 %v65
    %315 = vmatprep.subr.mxu0 0.0
    %316 = vmatpush1.msra.mxu0 %v66
    %317 = vmatprep.subr.mxu0 0.0
    %318 = vmatpush1.msra.mxu0 %v67
    %319 = vmatprep.subr.mxu0 0.0
    %320 = vmatpush1.msra.mxu0 %v68
    %321 = vmatprep.subr.mxu0 0.0
    %322 = vmatpush1.msra.mxu0 %v69
    %323 = vmatprep.subr.mxu0 0.0
    %324 = vmatpush1.msra.mxu0 %v70
    %325 = vmatprep.subr.mxu0 0.0
    %326 = vmatpush1.msra.mxu0 %v71
    %327 = vmatprep.subr.mxu0 0.0
    %328 = vmatpush1.msra.mxu0 %v72
    %329 = vmatprep.subr.mxu0 0.0
    %330 = vmatpush1.msra.mxu0 %v73
    %331 = vmatprep.subr.mxu0 0.0
    %332 = vmatpush1.msra.mxu0 %v74
    %333 = vmatprep.subr.mxu0 0.0
    %334 = vmatpush1.msra.mxu0 0.0
    %335 = vmatprep.subr.mxu0 0.0
    %336 = vmatpush1.msra.mxu0 0.0
    %337 = vmatprep.subr.mxu0 0.0
    %338 = vmatpush1.msra.mxu0 0.0
    %339 = vmatprep.subr.mxu0 0.0
    %340 = vmatpush1.msra.mxu0 0.0
    %341 = vmatprep.subr.mxu0 0.0
    %342 = vmatpush1.msra.mxu0 0.0
    %343 = vmatprep.subr.mxu0 0.0
    %344 = vmatpush1.msra.mxu0 0.0
    %345 = vmatprep.subr.mxu0 0.0
    %346 = vmatpush1.msra.mxu0 0.0
    %347 = vmatprep.subr.mxu0 0.0
    %348 = vmatpush1.msra.mxu0 0.0
    %349 = vmatprep.subr.mxu0 0.0
    %350 = vmatpush1.msra.mxu0 0.0
    %351 = vmatprep.subr.mxu0 0.0
    %352 = vmatpush1.msra.mxu0 0.0
    %353 = vmatprep.subr.mxu0 0.0
    %354 = vmatpush1.msra.mxu0 0.0
    %355 = vmatprep.subr.mxu0 0.0
    %356 = vmatpush1.msra.mxu0 0.0
    %357 = vmatprep.subr.mxu0 0.0
    %358 = vmatpush1.msra.mxu0 0.0
    %359 = vmatprep.subr.mxu0 0.0
    %360 = vmatpush1.msra.mxu0 0.0
    %361 = vmatprep.subr.mxu0 0.0
    %362 = vmatpush1.msra.mxu0 0.0
    %363 = vmatprep.subr.mxu0 0.0
    %364 = vmatpush1.msra.mxu0 0.0
    %365 = vmatprep.mubr.f32.mxu0 0.0
    %366 = vmatmul.mubr.f32.gmra.mrb[0].mxu0 %v298
    %v367 = vpop.f32.mrb[0].mxu0
    %v368 = vadd.f32 0.0, %v367
    %v369 = vpop.f32.mrb[0].mxu0
    %370 = vdwg.mxu0
    %v371 = vadd.f32 %v300, %v368
    %v372 = vtanh.pop %v371
    %s373 = scalar_lea.vmem [#allocation2], 40
    %v374 = vld [vmem:[%s373] sm:$0xff]
    %375 = vmatprep.subr.mxu0 0.0
    %376 = vmatpush1.msra.mxu0 %v59
    %377 = vmatprep.subr.mxu0 0.0
    %378 = vmatpush1.msra.mxu0 %v60
    %379 = vmatprep.subr.mxu0 0.0
    %380 = vmatpush1.msra.mxu0 %v61
    %381 = vmatprep.subr.mxu0 0.0
    %382 = vmatpush1.msra.mxu0 %v62
    %383 = vmatprep.subr.mxu0 0.0
    %384 = vmatpush1.msra.mxu0 %v63
    %385 = vmatprep.subr.mxu0 0.0
    %386 = vmatpush1.msra.mxu0 %v64
    %387 = vmatprep.subr.mxu0 0.0
    %388 = vmatpush1.msra.mxu0 %v65
    %389 = vmatprep.subr.mxu0 0.0
    %390 = vmatpush1.msra.mxu0 %v66
    %391 = vmatprep.subr.mxu0 0.0
    %392 = vmatpush1.msra.mxu0 %v67
    %393 = vmatprep.subr.mxu0 0.0
    %394 = vmatpush1.msra.mxu0 %v68
    %395 = vmatprep.subr.mxu0 0.0
    %396 = vmatpush1.msra.mxu0 %v69
    %397 = vmatprep.subr.mxu0 0.0
    %398 = vmatpush1.msra.mxu0 %v70
    %399 = vmatprep.subr.mxu0 0.0
    %400 = vmatpush1.msra.mxu0 %v71
    %401 = vmatprep.subr.mxu0 0.0
    %402 = vmatpush1.msra.mxu0 %v72
    %403 = vmatprep.subr.mxu0 0.0
    %404 = vmatpush1.msra.mxu0 %v73
    %405 = vmatprep.subr.mxu0 0.0
    %406 = vmatpush1.msra.mxu0 %v74
    %407 = vmatprep.subr.mxu0 0.0
    %408 = vmatpush1.msra.mxu0 0.0
    %409 = vmatprep.subr.mxu0 0.0
    %410 = vmatpush1.msra.mxu0 0.0
    %411 = vmatprep.subr.mxu0 0.0
    %412 = vmatpush1.msra.mxu0 0.0
    %413 = vmatprep.subr.mxu0 0.0
    %414 = vmatpush1.msra.mxu0 0.0
    %415 = vmatprep.subr.mxu0 0.0
    %416 = vmatpush1.msra.mxu0 0.0
    %417 = vmatprep.subr.mxu0 0.0
    %418 = vmatpush1.msra.mxu0 0.0
    %419 = vmatprep.subr.mxu0 0.0
    %420 = vmatpush1.msra.mxu0 0.0
    %421 = vmatprep.subr.mxu0 0.0
    %422 = vmatpush1.msra.mxu0 0.0
    %423 = vmatprep.subr.mxu0 0.0
    %424 = vmatpush1.msra.mxu0 0.0
    %425 = vmatprep.subr.mxu0 0.0
    %426 = vmatpush1.msra.mxu0 0.0
    %427 = vmatprep.subr.mxu0 0.0
    %428 = vmatpush1.msra.mxu0 0.0
    %429 = vmatprep.subr.mxu0 0.0
    %430 = vmatpush1.msra.mxu0 0.0
    %431 = vmatprep.subr.mxu0 0.0
    %432 = vmatpush1.msra.mxu0 0.0
    %433 = vmatprep.subr.mxu0 0.0
    %434 = vmatpush1.msra.mxu0 0.0
    %435 = vmatprep.subr.mxu0 0.0
    %436 = vmatpush1.msra.mxu0 0.0
    %437 = vmatprep.subr.mxu0 0.0
    %438 = vmatpush1.msra.mxu0 0.0
    %439 = vmatprep.mubr.f32.mxu0 0.0
    %440 = vmatmul.mubr.f32.gmra.mrb[0].mxu0 %v372
    %v441 = vpop.f32.mrb[0].mxu0
    %v442 = vadd.f32 0.0, %v441
    %v443 = vpop.f32.mrb[0].mxu0
    %444 = vdwg.mxu0
    %v445 = vadd.f32 %v374, %v442
    %v446 = vtanh.pop %v445
    %s447 = scalar_lea.vmem [#allocation2], 48
    %v448 = vld [vmem:[%s447] sm:$0xff]
    %449 = vmatprep.subr.mxu0 0.0
    %450 = vmatpush1.msra.mxu0 %v59
    %451 = vmatprep.subr.mxu0 0.0
    %452 = vmatpush1.msra.mxu0 %v60
    %453 = vmatprep.subr.mxu0 0.0
    %454 = vmatpush1.msra.mxu0 %v61
    %455 = vmatprep.subr.mxu0 0.0
    %456 = vmatpush1.msra.mxu0 %v62
    %457 = vmatprep.subr.mxu0 0.0
    %458 = vmatpush1.msra.mxu0 %v63
    %459 = vmatprep.subr.mxu0 0.0
    %460 = vmatpush1.msra.mxu0 %v64
    %461 = vmatprep.subr.mxu0 0.0
    %462 = vmatpush1.msra.mxu0 %v65
    %463 = vmatprep.subr.mxu0 0.0
    %464 = vmatpush1.msra.mxu0 %v66
    %465 = vmatprep.subr.mxu0 0.0
    %466 = vmatpush1.msra.mxu0 %v67
    %467 = vmatprep.subr.mxu0 0.0
    %468 = vmatpush1.msra.mxu0 %v68
    %469 = vmatprep.subr.mxu0 0.0
    %470 = vmatpush1.msra.mxu0 %v69
    %471 = vmatprep.subr.mxu0 0.0
    %472 = vmatpush1.msra.mxu0 %v70
    %473 = vmatprep.subr.mxu0 0.0
    %474 = vmatpush1.msra.mxu0 %v71
    %475 = vmatprep.subr.mxu0 0.0
    %476 = vmatpush1.msra.mxu0 %v72
    %477 = vmatprep.subr.mxu0 0.0
    %478 = vmatpush1.msra.mxu0 %v73
    %479 = vmatprep.subr.mxu0 0.0
    %480 = vmatpush1.msra.mxu0 %v74
    %481 = vmatprep.subr.mxu0 0.0
    %482 = vmatpush1.msra.mxu0 0.0
    %483 = vmatprep.subr.mxu0 0.0
    %484 = vmatpush1.msra.mxu0 0.0
    %485 = vmatprep.subr.mxu0 0.0
    %486 = vmatpush1.msra.mxu0 0.0
    %487 = vmatprep.subr.mxu0 0.0
    %488 = vmatpush1.msra.mxu0 0.0
    %489 = vmatprep.subr.mxu0 0.0
    %490 = vmatpush1.msra.mxu0 0.0
    %491 = vmatprep.subr.mxu0 0.0
    %492 = vmatpush1.msra.mxu0 0.0
    %493 = vmatprep.subr.mxu0 0.0
    %494 = vmatpush1.msra.mxu0 0.0
    %495 = vmatprep.subr.mxu0 0.0
    %496 = vmatpush1.msra.mxu0 0.0
    %497 = vmatprep.subr.mxu0 0.0
    %498 = vmatpush1.msra.mxu0 0.0
    %499 = vmatprep.subr.mxu0 0.0
    %500 = vmatpush1.msra.mxu0 0.0
    %501 = vmatprep.subr.mxu0 0.0
    %502 = vmatpush1.msra.mxu0 0.0
    %503 = vmatprep.subr.mxu0 0.0
    %504 = vmatpush1.msra.mxu0 0.0
    %505 = vmatprep.subr.mxu0 0.0
    %506 = vmatpush1.msra.mxu0 0.0
    %507 = vmatprep.subr.mxu0 0.0
    %508 = vmatpush1.msra.mxu0 0.0
    %509 = vmatprep.subr.mxu0 0.0
    %510 = vmatpush1.msra.mxu0 0.0
    %511 = vmatprep.subr.mxu0 0.0
    %512 = vmatpush1.msra.mxu0 0.0
    %513 = vmatprep.mubr.f32.mxu0 0.0
    %514 = vmatmul.mubr.f32.gmra.mrb[0].mxu0 %v446
    %v515 = vpop.f32.mrb[0].mxu0
    %v516 = vadd.f32 0.0, %v515
    %v517 = vpop.f32.mrb[0].mxu0
    %518 = vdwg.mxu0
    %v519 = vadd.f32 %v448, %v516
    %v520 = vtanh.pop %v519
    %s521 = scalar_lea.vmem [#allocation2], 56
    %v522 = vld [vmem:[%s521] sm:$0xff]
    %523 = vmatprep.subr.mxu0 0.0
    %524 = vmatpush1.msra.mxu0 %v59
    %525 = vmatprep.subr.mxu0 0.0
    %526 = vmatpush1.msra.mxu0 %v60
    %527 = vmatprep.subr.mxu0 0.0
    %528 = vmatpush1.msra.mxu0 %v61
    %529 = vmatprep.subr.mxu0 0.0
    %530 = vmatpush1.msra.mxu0 %v62
    %531 = vmatprep.subr.mxu0 0.0
    %532 = vmatpush1.msra.mxu0 %v63
    %533 = vmatprep.subr.mxu0 0.0
    %534 = vmatpush1.msra.mxu0 %v64
    %535 = vmatprep.subr.mxu0 0.0
    %536 = vmatpush1.msra.mxu0 %v65
    %537 = vmatprep.subr.mxu0 0.0
    %538 = vmatpush1.msra.mxu0 %v66
    %539 = vmatprep.subr.mxu0 0.0
    %540 = vmatpush1.msra.mxu0 %v67
    %541 = vmatprep.subr.mxu0 0.0
    %542 = vmatpush1.msra.mxu0 %v68
    %543 = vmatprep.subr.mxu0 0.0
    %544 = vmatpush1.msra.mxu0 %v69
    %545 = vmatprep.subr.mxu0 0.0
    %546 = vmatpush1.msra.mxu0 %v70
    %547 = vmatprep.subr.mxu0 0.0
    %548 = vmatpush1.msra.mxu0 %v71
    %549 = vmatprep.subr.mxu0 0.0
    %550 = vmatpush1.msra.mxu0 %v72
    %551 = vmatprep.subr.mxu0 0.0
    %552 = vmatpush1.msra.mxu0 %v73
    %553 = vmatprep.subr.mxu0 0.0
    %554 = vmatpush1.msra.mxu0 %v74
    %555 = vmatprep.subr.mxu0 0.0
    %556 = vmatpush1.msra.mxu0 0.0
    %557 = vmatprep.subr.mxu0 0.0
    %558 = vmatpush1.msra.mxu0 0.0
    %559 = vmatprep.subr.mxu0 0.0
    %560 = vmatpush1.msra.mxu0 0.0
    %561 = vmatprep.subr.mxu0 0.0
    %562 = vmatpush1.msra.mxu0 0.0
    %563 = vmatprep.subr.mxu0 0.0
    %564 = vmatpush1.msra.mxu0 0.0
    %565 = vmatprep.subr.mxu0 0.0
    %566 = vmatpush1.msra.mxu0 0.0
    %567 = vmatprep.subr.mxu0 0.0
    %568 = vmatpush1.msra.mxu0 0.0
    %569 = vmatprep.subr.mxu0 0.0
    %570 = vmatpush1.msra.mxu0 0.0
    %571 = vmatprep.subr.mxu0 0.0
    %572 = vmatpush1.msra.mxu0 0.0
    %573 = vmatprep.subr.mxu0 0.0
    %574 = vmatpush1.msra.mxu0 0.0
    %575 = vmatprep.subr.mxu0 0.0
    %576 = vmatpush1.msra.mxu0 0.0
    %577 = vmatprep.subr.mxu0 0.0
    %578 = vmatpush1.msra.mxu0 0.0
    %579 = vmatprep.subr.mxu0 0.0
    %580 = vmatpush1.msra.mxu0 0.0
    %581 = vmatprep.subr.mxu0 0.0
    %582 = vmatpush1.msra.mxu0 0.0
    %583 = vmatprep.subr.mxu0 0.0
    %584 = vmatpush1.msra.mxu0 0.0
    %585 = vmatprep.subr.mxu0 0.0
    %586 = vmatpush1.msra.mxu0 0.0
    %587 = vmatprep.mubr.f32.mxu0 0.0
    %588 = vmatmul.mubr.f32.gmra.mrb[0].mxu0 %v520
    %v589 = vpop.f32.mrb[0].mxu0
    %v590 = vadd.f32 0.0, %v589
    %v591 = vpop.f32.mrb[0].mxu0
    %592 = vdwg.mxu0
    %v593 = vadd.f32 %v522, %v590
    %v594 = vtanh.pop %v593
    %v595 = vld [vmem:[#allocation7] sm:$0xff]
    %v596 = vld [vmem:[#allocation7 + $0x8] sm:$0xff]
    %v597 = vld [vmem:[#allocation7 + $0x10] sm:$0xff]
    %v598 = vld [vmem:[#allocation7 + $0x18] sm:$0xff]
    %v599 = vld [vmem:[#allocation7 + $0x20] sm:$0xff]
    %v600 = vld [vmem:[#allocation7 + $0x28] sm:$0xff]
    %v601 = vld [vmem:[#allocation7 + $0x30] sm:$0xff]
    %v602 = vld [vmem:[#allocation7 + $0x38] sm:$0xff]
    %v603 = vld [vmem:[#allocation7 + $0x40] sm:$0xff]
    %v604 = vld [vmem:[#allocation7 + $0x48] sm:$0xff]
    %v605 = vld [vmem:[#allocation7 + $0x50] sm:$0xff]
    %v606 = vld [vmem:[#allocation7 + $0x58] sm:$0xff]
    %v607 = vld [vmem:[#allocation7 + $0x60] sm:$0xff]
    %v608 = vld [vmem:[#allocation7 + $0x68] sm:$0xff]
    %v609 = vld [vmem:[#allocation7 + $0x70] sm:$0xff]
    %v610 = vld [vmem:[#allocation7 + $0x78] sm:$0xff]
    %v611 = vld [vmem:[%s3] sm:$0x1]
    %v613 = vlaneseq
    %v614 = vshrl.u32 %v613, 7
    %v615 = vsub.s32 0, %v614
    %v616 = vrot.slane %v611, %v615
    %618 = vmatprep.subr.mxu0 0.0
    %619 = vmatpush1.msra.mxu0 %v595
    %620 = vmatprep.subr.mxu0 0.0
    %621 = vmatpush1.msra.mxu0 %v596
    %622 = vmatprep.subr.mxu0 0.0
    %623 = vmatpush1.msra.mxu0 %v597
    %624 = vmatprep.subr.mxu0 0.0
    %625 = vmatpush1.msra.mxu0 %v598
    %626 = vmatprep.subr.mxu0 0.0
    %627 = vmatpush1.msra.mxu0 %v599
    %628 = vmatprep.subr.mxu0 0.0
    %629 = vmatpush1.msra.mxu0 %v600
    %630 = vmatprep.subr.mxu0 0.0
    %631 = vmatpush1.msra.mxu0 %v601
    %632 = vmatprep.subr.mxu0 0.0
    %633 = vmatpush1.msra.mxu0 %v602
    %634 = vmatprep.subr.mxu0 0.0
    %635 = vmatpush1.msra.mxu0 %v603
    %636 = vmatprep.subr.mxu0 0.0
    %637 = vmatpush1.msra.mxu0 %v604
    %638 = vmatprep.subr.mxu0 0.0
    %639 = vmatpush1.msra.mxu0 %v605
    %640 = vmatprep.subr.mxu0 0.0
    %641 = vmatpush1.msra.mxu0 %v606
    %642 = vmatprep.subr.mxu0 0.0
    %643 = vmatpush1.msra.mxu0 %v607
    %644 = vmatprep.subr.mxu0 0.0
    %645 = vmatpush1.msra.mxu0 %v608
    %646 = vmatprep.subr.mxu0 0.0
    %647 = vmatpush1.msra.mxu0 %v609
    %648 = vmatprep.subr.mxu0 0.0
    %649 = vmatpush1.msra.mxu0 %v610
    %650 = vmatprep.subr.mxu0 0.0
    %651 = vmatpush1.msra.mxu0 0.0
    %652 = vmatprep.subr.mxu0 0.0
    %653 = vmatpush1.msra.mxu0 0.0
    %654 = vmatprep.subr.mxu0 0.0
    %655 = vmatpush1.msra.mxu0 0.0
    %656 = vmatprep.subr.mxu0 0.0
    %657 = vmatpush1.msra.mxu0 0.0
    %658 = vmatprep.subr.mxu0 0.0
    %659 = vmatpush1.msra.mxu0 0.0
    %660 = vmatprep.subr.mxu0 0.0
    %661 = vmatpush1.msra.mxu0 0.0
    %662 = vmatprep.subr.mxu0 0.0
    %663 = vmatpush1.msra.mxu0 0.0
    %664 = vmatprep.subr.mxu0 0.0
    %665 = vmatpush1.msra.mxu0 0.0
    %666 = vmatprep.subr.mxu0 0.0
    %667 = vmatpush1.msra.mxu0 0.0
    %668 = vmatprep.subr.mxu0 0.0
    %669 = vmatpush1.msra.mxu0 0.0
    %670 = vmatprep.subr.mxu0 0.0
    %671 = vmatpush1.msra.mxu0 0.0
    %672 = vmatprep.subr.mxu0 0.0
    %673 = vmatpush1.msra.mxu0 0.0
    %674 = vmatprep.subr.mxu0 0.0
    %675 = vmatpush1.msra.mxu0 0.0
    %676 = vmatprep.subr.mxu0 0.0
    %677 = vmatpush1.msra.mxu0 0.0
    %678 = vmatprep.subr.mxu0 0.0
    %679 = vmatpush1.msra.mxu0 0.0
    %680 = vmatprep.subr.mxu0 0.0
    %681 = vmatpush1.msra.mxu0 0.0
    %682 = vmatprep.mubr.f32.mxu0 0.0
    %683 = vmatmul.mubr.f32.gmra.mrb[0].mxu0 %v594
    %v684 = vpop.f32.mrb[0].mxu0
    %v685 = vadd.f32 %v616, %v684
    %v686 = vpop.f32.mrb[0].mxu0
    %687 = vdwg.mxu0
    %688 = vst [vmem:[#allocation8] sm:$0xff] %v685
    // Predicated region
    $region30: #{tpu_custom_call.1} parent=1 // pred_check
      _
    $region31: #{tpu_custom_call.1} parent=1 // pred_check_branch
      %690 = sbr.rel (0) target = $region33
    $region32: #{tpu_custom_call.1} parent=1 // pred_region
      %s692 = ssub.s32 128, 128
      %693 = vsyncadd [#allocation4], %s692
      %s695 = sshll.u32 [#allocation8], 4
      %s696 = int_to_ptr.vmem [resolvable:$true] %s695
      %698 = dma.vmem_to_hbm [thread:$0]  %s696, 128, %s4, [#allocation4]
    $region33: #{tpu_custom_call.1} parent=1 // pred_fallthru
      _
    // Predicated region
    $region34: #{tpu_custom_call.1} parent=1 // pred_check
      _
    $region35: #{tpu_custom_call.1} parent=1 // pred_check_branch
      %700 = sbr.rel (0) target = $region37
    $region36: #{tpu_custom_call.1} parent=1 // pred_region
      %701 = dma.done [#allocation4], 128
    $region37: #{tpu_custom_call.1} parent=1 // pred_fallthru
      _
    %702 = vsyncpa [#allocation3], 1
    %703 = vsyncpa [#allocation6], 1
    %704 = vsyncpa [#allocation4], 1

</llo_original>
